<compile_context>
chip_gen: v6e
topology: v6e:2x2x1
jax: 0.10.0
libtpu: 0.0.40
codegen_flags: <defaults>
</compile_context>

<pallas_src>
import jax
import jax.numpy as jnp
from jax.experimental import pallas as pl
from jax.experimental.pallas import tpu as pltpu

# ---- model dimensions -------------------------------------------------------
IMG_SHAPE = (7, 7, 3)                                     # obs_space['image']
IMG_FLAT = IMG_SHAPE[0] * IMG_SHAPE[1] * IMG_SHAPE[2]     # 147
IMAGE_EMBED = 64                                          # cfg.image_embed_size
TOKEN_EMBED = 32                                          # cfg.token_embed_size
NUM_LSTM_LAYERS = 1                                       # cfg.num_lstm_layers
NUM_COLORS = 6                                            # len(COLOR_TO_IDX)
NUM_ACTIONS = 7                                           # action_space.n
SEMI_MEM = IMAGE_EMBED * NUM_LSTM_LAYERS                  # semi_memory_size = 64
MEM_SIZE = 2 * SEMI_MEM                                   # memory_size = 128
EMBED_SIZE = SEMI_MEM + TOKEN_EMBED                       # 96  (use_text=False)
HEAD_PAD = 128                                            # per-head lane padding
IN_WIDTH = IMG_FLAT + NUM_COLORS                          # 153: [image | onehot]
ALIGN = 16                                                # bf16 sublane alignment
MAX_TB = 512                                              # v5e-safe tile cap

# TODO(synk): use_text branch (word_embedding + GRU text_rnn) is not exercised
# because the chosen config has cfg.use_text=False.


def _forward_kernel(x_ref, mem_ref,
                    se_w1, se_b1,
                    w_xh, w_hh, b_lstm,
                    w1_h, t1, b1,
                    w2, b2,
                    head_ref, newmem_ref):
    f32 = jnp.float32
    bf16 = jnp.bfloat16
    H = IMAGE_EMBED

    x = x_ref[...]                                                   # (TB, 153) bf16

    # ---- state_embed layer 1 + ReLU (one-hot rows of se_w1 are zero) ---------
    h1 = jnp.maximum(
        jnp.dot(x, se_w1[...], preferred_element_type=f32) + se_b1[...], 0.0)

    # ---- single-step LSTM; state_embed layer 2 folded into w_xh at pack time -
    mem = mem_ref[...]                                               # (TB, 128) f32
    h_prev = mem[:, :SEMI_MEM]
    c_prev = mem[:, SEMI_MEM:]
    gates = (jnp.dot(h1.astype(bf16), w_xh[...], preferred_element_type=f32)
             + jnp.dot(h_prev.astype(bf16), w_hh[...], preferred_element_type=f32)
             + b_lstm[...])                                          # (TB, 256) [i|f|o|g]
    sig = jax.nn.sigmoid(gates[:, :3 * H])                           # i, f, o together
    g_g = jnp.tanh(gates[:, 3 * H:])
    i_g = sig[:, :H]
    f_g = sig[:, H:2 * H]
    o_g = sig[:, 2 * H:3 * H]
    c_new = f_g * c_prev + i_g * g_g
    h_new = o_g * jnp.tanh(c_new)                                    # (TB, 64)

    # ---- fused actor+critic first layer; one-hot (target-embed) contribution
    #      recovered from x via zero-padded rows of t1 --------------------------
    pre1 = (jnp.dot(h_new.astype(bf16), w1_h[...], preferred_element_type=f32)
            + jnp.dot(x, t1[...], preferred_element_type=f32)
            + b1[...])                                               # (TB, 256)
    act1 = jnp.tanh(pre1)

    # ---- fused block-diagonal second layer: logits lanes 0..6, value lane 7 --
    head = (jnp.dot(act1.astype(bf16), w2[...], preferred_element_type=f32)
            + b2[...])                                               # (TB, 128)

    # ---- log-softmax over the 7 action logits only ----------------------------
    lanes = jax.lax.broadcasted_iota(jnp.int32, head.shape, 1)
    is_logit = lanes < NUM_ACTIONS
    masked = jnp.where(is_logit, head, -jnp.inf)
    m = jnp.max(masked, axis=-1, keepdims=True)
    e = jnp.exp(masked - m)                                          # exp(-inf) = 0
    lse = jnp.log(jnp.sum(e, axis=-1, keepdims=True))
    logp = head - m - lse
    # Single lane-dense store: lanes 0..6 = log-probs, lane 7 = value, rest junk.
    head_ref[...] = jnp.where(is_logit, logp, head)

    # ---- new memory = [h_new | c_new] as one full-width 128-lane store --------
    newmem_ref[...] = jnp.concatenate([h_new, c_new], axis=-1)


def pack_params(p):
    """Fold / fuse / cast the raw (torch-layout) parameters for the kernel.

    All algebra is done in f32; a single bf16 cast happens at the end.
    """
    f32, bf16 = jnp.float32, jnp.bfloat16
    H = IMAGE_EMBED

    def reorder_gates(w):
        # PyTorch gate order [i|f|g|o] -> kernel order [i|f|o|g] along last axis.
        return jnp.concatenate([w[..., :2 * H], w[..., 3 * H:4 * H],
                                w[..., 2 * H:3 * H]], axis=-1)

    # state_embed layer 1, extended with zero rows for the appended one-hot lanes.
    se_w1 = jnp.zeros((IN_WIDTH, IMAGE_EMBED), f32)
    se_w1 = se_w1.at[:IMG_FLAT, :].set(p['se_w1'])

    # state_embed layer 2 folded into the LSTM input weights / bias.
    w_xh = reorder_gates(p['se_w2'] @ p['w_ih'])                     # (64, 256)
    w_hh = reorder_gates(p['w_hh'])                                  # (64, 256)
    b_lstm = reorder_gates(p['b_lstm'] + p['se_b2'] @ p['w_ih'])     # (1, 256)

    # Fused actor/critic first layer, hidden-state part, padded to 2*HEAD_PAD lanes.
    w1_h = jnp.zeros((SEMI_MEM, 2 * HEAD_PAD), f32)
    w1_h = w1_h.at[:, :EMBED_SIZE].set(p['aw1_h'])
    w1_h = w1_h.at[:, HEAD_PAD:HEAD_PAD + EMBED_SIZE].set(p['cw1_h'])

    # Target embedding folded through the first layers (tgt_tbl @ aw1_t), placed
    # at the one-hot rows (147..152) of a (153, 256) matrix; image rows are zero.
    t1 = jnp.zeros((IN_WIDTH, 2 * HEAD_PAD), f32)
    t1 = t1.at[IMG_FLAT:, :EMBED_SIZE].set(p['tgt_tbl'] @ p['aw1_t'])
    t1 = t1.at[IMG_FLAT:, HEAD_PAD:HEAD_PAD + EMBED_SIZE].set(p['tgt_tbl'] @ p['cw1_t'])

    b1 = jnp.zeros((1, 2 * HEAD_PAD), f32)
    b1 = b1.at[:, :EMBED_SIZE].set(p['ab1'])
    b1 = b1.at[:, HEAD_PAD:HEAD_PAD + EMBED_SIZE].set(p['cb1'])

    # Block-diagonal fused second layer: actor logits -> cols 0..6, value -> col 7.
    w2 = jnp.zeros((2 * HEAD_PAD, HEAD_PAD), f32)
    w2 = w2.at[:EMBED_SIZE, :NUM_ACTIONS].set(p['aw2'])
    w2 = w2.at[HEAD_PAD:HEAD_PAD + EMBED_SIZE,
               NUM_ACTIONS:NUM_ACTIONS + 1].set(p['cw2'])

    b2 = jnp.zeros((1, HEAD_PAD), f32)
    b2 = b2.at[:, :NUM_ACTIONS].set(p['ab2'])
    b2 = b2.at[:, NUM_ACTIONS:NUM_ACTIONS + 1].set(p['cb2'])

    return dict(
        se_w1=se_w1.astype(bf16), se_b1=p['se_b1'],
        w_xh=w_xh.astype(bf16), w_hh=w_hh.astype(bf16), b_lstm=b_lstm,
        w1_h=w1_h.astype(bf16), t1=t1.astype(bf16), b1=b1,
        w2=w2.astype(bf16), b2=b2,
    )


def _round_up(v, m):
    return ((v + m - 1) // m) * m


def acmodel_forward(image, target_color, memory, p):
    """Returns (log_probs over actions, value, new_memory)."""
    B = image.shape[0]
    x_flat = image.reshape(B, IMG_FLAT).astype(jnp.float32)
    onehot = jax.nn.one_hot(target_color, NUM_COLORS, dtype=jnp.float32)
    xfull = jnp.concatenate([x_flat, onehot], axis=-1).astype(jnp.bfloat16)  # (B,153)
    mem = memory.astype(jnp.float32)

    # Batch tiling: one tile for B <= MAX_TB (no per-step overhead); for larger
    # batches use >= 2 balanced tiles of <= MAX_TB rows so the "parallel" grid
    # axis shards across TensorCores (v7x) while staying VMEM-safe on v5e.
    b_al = _round_up(max(B, ALIGN), ALIGN)
    if b_al <= MAX_TB:
        n_tiles = 1
        TB = b_al
    else:
        n_tiles = -(-b_al // MAX_TB)
        TB = _round_up(-(-b_al // n_tiles), ALIGN)
    BP = TB * n_tiles
    if BP != B:
        pad = BP - B
        xfull = jnp.pad(xfull, ((0, pad), (0, 0)))
        mem = jnp.pad(mem, ((0, pad), (0, 0)))

    def bspec(d):
        return pl.BlockSpec((TB, d), lambda i: (i, 0))

    def wspec(arr):
        return pl.BlockSpec(arr.shape, lambda i: (0, 0))

    in_specs = [
        bspec(IN_WIDTH), bspec(MEM_SIZE),
        wspec(p['se_w1']), wspec(p['se_b1']),
        wspec(p['w_xh']), wspec(p['w_hh']), wspec(p['b_lstm']),
        wspec(p['w1_h']), wspec(p['t1']), wspec(p['b1']),
        wspec(p['w2']), wspec(p['b2']),
    ]
    out_specs = (
        pl.BlockSpec((TB, HEAD_PAD), lambda i: (i, 0)),
        pl.BlockSpec((TB, MEM_SIZE), lambda i: (i, 0)),
    )
    out_shape = (
        jax.ShapeDtypeStruct((BP, HEAD_PAD), jnp.float32),   # [logp(0..6)|value(7)|...]
        jax.ShapeDtypeStruct((BP, MEM_SIZE), jnp.float32),   # new memory [h | c]
    )

    head, new_mem = pl.pallas_call(
        _forward_kernel,
        grid=(BP // TB,),
        in_specs=in_specs,
        out_specs=out_specs,
        out_shape=out_shape,
        input_output_aliases={1: 1},   # memory updated in place
        compiler_params=pltpu.CompilerParams(
            dimension_semantics=("parallel",)),
    )(xfull, mem,
      p['se_w1'], p['se_b1'],
      p['w_xh'], p['w_hh'], p['b_lstm'],
      p['w1_h'], p['t1'], p['b1'],
      p['w2'], p['b2'])

    logp = head[:B, :NUM_ACTIONS]
    value = head[:B, NUM_ACTIONS]
    return logp, value, new_mem[:B]


# ---- deterministic parameter init (mirrors init_params with init_var=True) ---
def init_model_params(key):
    ks = list(jax.random.split(key, 12))

    def lin_w(k, fan_in, fan_out):
        # torch: weight (out,in) ~ N(0,1), row-normalized over the in-dim.
        # Stored here as (in, out): normalize each output column over axis 0.
        w = jax.random.normal(k, (fan_in, fan_out), jnp.float32)
        return w / jnp.sqrt(jnp.sum(w * w, axis=0, keepdims=True))

    def zeros_b(n):
        return jnp.zeros((1, n), jnp.float32)

    H = IMAGE_EMBED
    bound = 1.0 / jnp.sqrt(jnp.float32(H))      # PyTorch LSTM default init bound

    params = {}
    # state_embed
    params['se_w1'] = lin_w(ks[0], IMG_FLAT, IMAGE_EMBED)
    params['se_b1'] = zeros_b(IMAGE_EMBED)
    params['se_w2'] = lin_w(ks[1], IMAGE_EMBED, IMAGE_EMBED)
    params['se_b2'] = zeros_b(IMAGE_EMBED)
    # LSTM (weights stored (in, 4H), torch gate order [i|f|g|o]; b = b_ih + b_hh)
    params['w_ih'] = jax.random.uniform(ks[2], (IMAGE_EMBED, 4 * H), jnp.float32,
                                        -bound, bound)
    params['w_hh'] = jax.random.uniform(ks[3], (SEMI_MEM, 4 * H), jnp.float32,
                                        -bound, bound)
    params['b_lstm'] = (
        jax.random.uniform(ks[4], (1, 4 * H), jnp.float32, -bound, bound)
        + jax.random.uniform(ks[10], (1, 4 * H), jnp.float32, -bound, bound))
    # target_embed (Embedding ~ N(0,1))
    params['tgt_tbl'] = jax.random.normal(ks[5], (NUM_COLORS, TOKEN_EMBED), jnp.float32)
    # actor
    aw1 = lin_w(ks[6], EMBED_SIZE, EMBED_SIZE)
    params['aw1_h'] = aw1[:SEMI_MEM, :]
    params['aw1_t'] = aw1[SEMI_MEM:, :]
    params['ab1'] = zeros_b(EMBED_SIZE)
    params['aw2'] = lin_w(ks[7], EMBED_SIZE, NUM_ACTIONS)
    params['ab2'] = zeros_b(NUM_ACTIONS)
    # critic
    cw1 = lin_w(ks[8], EMBED_SIZE, EMBED_SIZE)
    params['cw1_h'] = cw1[:SEMI_MEM, :]
    params['cw1_t'] = cw1[SEMI_MEM:, :]
    params['cb1'] = zeros_b(EMBED_SIZE)
    params['cw2'] = lin_w(ks[9], EMBED_SIZE, 1)
    params['cb2'] = zeros_b(1)
    return params


if __name__ == "__main__":
    key = jax.random.PRNGKey(0)
    kp, ki, kt, km = jax.random.split(key, 4)

    raw_params = init_model_params(kp)
    packed = pack_params(raw_params)

    B = 8
    image = jax.random.normal(ki, (B,) + IMG_SHAPE, jnp.float32)
    target_color = jax.random.randint(kt, (B,), 0, NUM_COLORS)
    memory = jax.random.normal(km, (B, MEM_SIZE), jnp.float32) * 0.1

    fwd = jax.jit(acmodel_forward)
    logp, value, new_mem = fwd(image, target_color, memory, packed)
    jax.block_until_ready((logp, value, new_mem))

    assert logp.shape == (B, NUM_ACTIONS)
    assert value.shape == (B,)
    assert new_mem.shape == (B, MEM_SIZE)
    # log-softmax sanity: action probabilities sum to 1.
    assert bool(jnp.all(jnp.abs(jnp.exp(logp).sum(-1) - 1.0) < 1e-3))
    assert bool(jnp.all(jnp.isfinite(new_mem)))
    print("KERNEL_OK")
</pallas_src>

<mosaic_0001>
module attributes {stable_mosaic.version = 11 : i64} {
  func.func @_forward_kernel(%arg0: i32, %arg1: memref<16x153xbf16, #tpu.memory_space<vmem>>, %arg2: memref<16x128xf32, #tpu.memory_space<vmem>>, %arg3: memref<153x64xbf16, #tpu.memory_space<vmem>>, %arg4: memref<1x64xf32, #tpu.memory_space<vmem>>, %arg5: memref<64x256xbf16, #tpu.memory_space<vmem>>, %arg6: memref<64x256xbf16, #tpu.memory_space<vmem>>, %arg7: memref<1x256xf32, #tpu.memory_space<vmem>>, %arg8: memref<64x256xbf16, #tpu.memory_space<vmem>>, %arg9: memref<153x256xbf16, #tpu.memory_space<vmem>>, %arg10: memref<1x256xf32, #tpu.memory_space<vmem>>, %arg11: memref<256x128xbf16, #tpu.memory_space<vmem>>, %arg12: memref<1x128xf32, #tpu.memory_space<vmem>>, %arg13: memref<16x128xf32, #tpu.memory_space<vmem>>, %arg14: memref<16x128xf32, #tpu.memory_space<vmem>>) attributes {dimension_semantics = [#tpu.dimension_semantics<parallel>], iteration_bounds = array<i64: 1>, scalar_prefetch = 0 : i64, scratch_operands = 0 : i64, tpu.core_type = #tpu.core_type<tc>, window_params = [{transform_indices = @transform_0, window_bounds = array<i64: 16, 153>}, {transform_indices = @transform_1, window_bounds = array<i64: 16, 128>}, {pipeline_mode = #tpu.pipeline_mode<synchronous>, transform_indices = @transform_2, window_bounds = array<i64: 153, 64>}, {pipeline_mode = #tpu.pipeline_mode<synchronous>, transform_indices = @transform_3, window_bounds = array<i64: 1, 64>}, {pipeline_mode = #tpu.pipeline_mode<synchronous>, transform_indices = @transform_4, window_bounds = array<i64: 64, 256>}, {pipeline_mode = #tpu.pipeline_mode<synchronous>, transform_indices = @transform_5, window_bounds = array<i64: 64, 256>}, {pipeline_mode = #tpu.pipeline_mode<synchronous>, transform_indices = @transform_6, window_bounds = array<i64: 1, 256>}, {pipeline_mode = #tpu.pipeline_mode<synchronous>, transform_indices = @transform_7, window_bounds = array<i64: 64, 256>}, {pipeline_mode = #tpu.pipeline_mode<synchronous>, transform_indices = @transform_8, window_bounds = array<i64: 153, 256>}, {pipeline_mode = #tpu.pipeline_mode<synchronous>, transform_indices = @transform_9, window_bounds = array<i64: 1, 256>}, {pipeline_mode = #tpu.pipeline_mode<synchronous>, transform_indices = @transform_10, window_bounds = array<i64: 256, 128>}, {pipeline_mode = #tpu.pipeline_mode<synchronous>, transform_indices = @transform_11, window_bounds = array<i64: 1, 128>}, {transform_indices = @transform_12, window_bounds = array<i64: 16, 128>}, {transform_indices = @transform_13, window_bounds = array<i64: 16, 128>}]} {
    %c0 = arith.constant 0 : index
    %c0_0 = arith.constant 0 : index
    %0 = vector.load %arg1[%c0, %c0_0] : memref<16x153xbf16, #tpu.memory_space<vmem>>, vector<16x153xbf16>
    %c0_1 = arith.constant 0 : index
    %c0_2 = arith.constant 0 : index
    %1 = vector.load %arg3[%c0_1, %c0_2] : memref<153x64xbf16, #tpu.memory_space<vmem>>, vector<153x64xbf16>
    %cst = arith.constant dense<0.000000e+00> : vector<16x64xf32>
    %2 = tpu.matmul %0, %1, %cst {dimension_numbers = #tpu.dot_dimension_numbers<[1], [0], [0], [1], [0, 0, 1, 1], [], []>} : vector<16x153xbf16>, vector<153x64xbf16>, vector<16x64xf32> -> vector<16x64xf32>
    %c0_3 = arith.constant 0 : index
    %c0_4 = arith.constant 0 : index
    %3 = vector.load %arg4[%c0_3, %c0_4] : memref<1x64xf32, #tpu.memory_space<vmem>>, vector<1x64xf32>
    %4 = vector.broadcast %3 : vector<1x64xf32> to vector<16x64xf32>
    %5 = arith.addf %2, %4 : vector<16x64xf32>
    %cst_5 = arith.constant 0.000000e+00 : f32
    %6 = vector.broadcast %cst_5 : f32 to vector<16x64xf32>
    %7 = arith.maximumf %5, %6 : vector<16x64xf32>
    %c0_6 = arith.constant 0 : index
    %c0_7 = arith.constant 0 : index
    %8 = vector.load %arg2[%c0_6, %c0_7] : memref<16x128xf32, #tpu.memory_space<vmem>>, vector<16x128xf32>
    %9 = vector.extract_strided_slice %8 {offsets = [0, 0], sizes = [16, 64], strides = [1, 1]} : vector<16x128xf32> to vector<16x64xf32>
    %10 = vector.extract_strided_slice %8 {offsets = [0, 64], sizes = [16, 64], strides = [1, 1]} : vector<16x128xf32> to vector<16x64xf32>
    %11 = arith.truncf %7 : vector<16x64xf32> to vector<16x64xbf16>
    %c0_8 = arith.constant 0 : index
    %c0_9 = arith.constant 0 : index
    %12 = vector.load %arg5[%c0_8, %c0_9] : memref<64x256xbf16, #tpu.memory_space<vmem>>, vector<64x256xbf16>
    %cst_10 = arith.constant dense<0.000000e+00> : vector<16x256xf32>
    %13 = tpu.matmul %11, %12, %cst_10 {dimension_numbers = #tpu.dot_dimension_numbers<[1], [0], [0], [1], [0, 0, 1, 1], [], []>} : vector<16x64xbf16>, vector<64x256xbf16>, vector<16x256xf32> -> vector<16x256xf32>
    %14 = arith.truncf %9 : vector<16x64xf32> to vector<16x64xbf16>
    %c0_11 = arith.constant 0 : index
    %c0_12 = arith.constant 0 : index
    %15 = vector.load %arg6[%c0_11, %c0_12] : memref<64x256xbf16, #tpu.memory_space<vmem>>, vector<64x256xbf16>
    %cst_13 = arith.constant dense<0.000000e+00> : vector<16x256xf32>
    %16 = tpu.matmul %14, %15, %cst_13 {dimension_numbers = #tpu.dot_dimension_numbers<[1], [0], [0], [1], [0, 0, 1, 1], [], []>} : vector<16x64xbf16>, vector<64x256xbf16>, vector<16x256xf32> -> vector<16x256xf32>
    %17 = arith.addf %13, %16 : vector<16x256xf32>
    %c0_14 = arith.constant 0 : index
    %c0_15 = arith.constant 0 : index
    %18 = vector.load %arg7[%c0_14, %c0_15] : memref<1x256xf32, #tpu.memory_space<vmem>>, vector<1x256xf32>
    %19 = vector.broadcast %18 : vector<1x256xf32> to vector<16x256xf32>
    %20 = arith.addf %17, %19 : vector<16x256xf32>
    %21 = vector.extract_strided_slice %20 {offsets = [0, 0], sizes = [16, 192], strides = [1, 1]} : vector<16x256xf32> to vector<16x192xf32>
    %22 = arith.negf %21 : vector<16x192xf32>
    %23 = math.exp %22 : vector<16x192xf32>
    %cst_16 = arith.constant 1.000000e+00 : f32
    %24 = vector.broadcast %cst_16 : f32 to vector<16x192xf32>
    %25 = arith.addf %24, %23 : vector<16x192xf32>
    %26 = arith.divf %24, %25 : vector<16x192xf32>
    %27 = vector.extract_strided_slice %20 {offsets = [0, 192], sizes = [16, 64], strides = [1, 1]} : vector<16x256xf32> to vector<16x64xf32>
    %28 = math.tanh %27 : vector<16x64xf32>
    %29 = vector.extract_strided_slice %26 {offsets = [0, 0], sizes = [16, 64], strides = [1, 1]} : vector<16x192xf32> to vector<16x64xf32>
    %30 = vector.extract_strided_slice %26 {offsets = [0, 64], sizes = [16, 64], strides = [1, 1]} : vector<16x192xf32> to vector<16x64xf32>
    %31 = vector.extract_strided_slice %26 {offsets = [0, 128], sizes = [16, 64], strides = [1, 1]} : vector<16x192xf32> to vector<16x64xf32>
    %32 = arith.mulf %30, %10 : vector<16x64xf32>
    %33 = arith.mulf %29, %28 : vector<16x64xf32>
    %34 = arith.addf %32, %33 : vector<16x64xf32>
    %35 = math.tanh %34 : vector<16x64xf32>
    %36 = arith.mulf %31, %35 : vector<16x64xf32>
    %37 = arith.truncf %36 : vector<16x64xf32> to vector<16x64xbf16>
    %c0_17 = arith.constant 0 : index
    %c0_18 = arith.constant 0 : index
    %38 = vector.load %arg8[%c0_17, %c0_18] : memref<64x256xbf16, #tpu.memory_space<vmem>>, vector<64x256xbf16>
    %cst_19 = arith.constant dense<0.000000e+00> : vector<16x256xf32>
    %39 = tpu.matmul %37, %38, %cst_19 {dimension_numbers = #tpu.dot_dimension_numbers<[1], [0], [0], [1], [0, 0, 1, 1], [], []>} : vector<16x64xbf16>, vector<64x256xbf16>, vector<16x256xf32> -> vector<16x256xf32>
    %c0_20 = arith.constant 0 : index
    %c0_21 = arith.constant 0 : index
    %40 = vector.load %arg9[%c0_20, %c0_21] : memref<153x256xbf16, #tpu.memory_space<vmem>>, vector<153x256xbf16>
    %cst_22 = arith.constant dense<0.000000e+00> : vector<16x256xf32>
    %41 = tpu.matmul %0, %40, %cst_22 {dimension_numbers = #tpu.dot_dimension_numbers<[1], [0], [0], [1], [0, 0, 1, 1], [], []>} : vector<16x153xbf16>, vector<153x256xbf16>, vector<16x256xf32> -> vector<16x256xf32>
    %42 = arith.addf %39, %41 : vector<16x256xf32>
    %c0_23 = arith.constant 0 : index
    %c0_24 = arith.constant 0 : index
    %43 = vector.load %arg10[%c0_23, %c0_24] : memref<1x256xf32, #tpu.memory_space<vmem>>, vector<1x256xf32>
    %44 = vector.broadcast %43 : vector<1x256xf32> to vector<16x256xf32>
    %45 = arith.addf %42, %44 : vector<16x256xf32>
    %46 = math.tanh %45 : vector<16x256xf32>
    %47 = arith.truncf %46 : vector<16x256xf32> to vector<16x256xbf16>
    %c0_25 = arith.constant 0 : index
    %c0_26 = arith.constant 0 : index
    %48 = vector.load %arg11[%c0_25, %c0_26] : memref<256x128xbf16, #tpu.memory_space<vmem>>, vector<256x128xbf16>
    %cst_27 = arith.constant dense<0.000000e+00> : vector<16x128xf32>
    %49 = tpu.matmul %47, %48, %cst_27 {dimension_numbers = #tpu.dot_dimension_numbers<[1], [0], [0], [1], [0, 0, 1, 1], [], []>} : vector<16x256xbf16>, vector<256x128xbf16>, vector<16x128xf32> -> vector<16x128xf32>
    %c0_28 = arith.constant 0 : index
    %c0_29 = arith.constant 0 : index
    %50 = vector.load %arg12[%c0_28, %c0_29] : memref<1x128xf32, #tpu.memory_space<vmem>>, vector<1x128xf32>
    %51 = vector.broadcast %50 : vector<1x128xf32> to vector<16x128xf32>
    %52 = arith.addf %49, %51 : vector<16x128xf32>
    %53 = tpu.iota {dimensions = array<i32: 1>} : vector<16x128xi32>
    %c7_i32 = arith.constant 7 : i32
    %54 = vector.broadcast %c7_i32 : i32 to vector<16x128xi32>
    %55 = arith.cmpi slt, %53, %54 : vector<16x128xi32>
    %cst_30 = arith.constant 0xFF800000 : f32
    %56 = vector.broadcast %cst_30 : f32 to vector<16x128xf32>
    %57 = arith.select %55, %52, %56 : vector<16x128xi1>, vector<16x128xf32>
    %cst_31 = arith.constant dense<0xFF800000> : vector<16xf32>
    %58 = vector.multi_reduction <maximumf>, %57, %cst_31 [1] : vector<16x128xf32> to vector<16xf32>
    %59 = vector.shape_cast %58 : vector<16xf32> to vector<16x1xf32>
    %60 = vector.broadcast %59 : vector<16x1xf32> to vector<16x128xf32>
    %61 = arith.subf %57, %60 : vector<16x128xf32>
    %62 = math.exp %61 : vector<16x128xf32>
    %cst_32 = arith.constant dense<0.000000e+00> : vector<16xf32>
    %63 = vector.multi_reduction <add>, %62, %cst_32 [1] : vector<16x128xf32> to vector<16xf32>
    %64 = vector.shape_cast %63 : vector<16xf32> to vector<16x1xf32>
    %65 = math.log %64 : vector<16x1xf32>
    %66 = vector.broadcast %59 : vector<16x1xf32> to vector<16x128xf32>
    %67 = arith.subf %52, %66 : vector<16x128xf32>
    %68 = vector.broadcast %65 : vector<16x1xf32> to vector<16x128xf32>
    %69 = arith.subf %67, %68 : vector<16x128xf32>
    %70 = arith.select %55, %69, %52 : vector<16x128xi1>, vector<16x128xf32>
    %c0_33 = arith.constant 0 : index
    %c0_34 = arith.constant 0 : index
    %71 = vector.load %arg13[%c0_33, %c0_34] : memref<16x128xf32, #tpu.memory_space<vmem>>, vector<16x128xf32>
    tpu.vector_store %arg13[%c0_33, %c0_34], %70 {strides = array<i32>} : memref<16x128xf32, #tpu.memory_space<vmem>>, vector<16x128xf32>,
    %72 = tpu.concatenate %36, %34 in 1 : vector<16x64xf32>, vector<16x64xf32> -> vector<16x128xf32>
    %c0_35 = arith.constant 0 : index
    %c0_36 = arith.constant 0 : index
    %73 = vector.load %arg14[%c0_35, %c0_36] : memref<16x128xf32, #tpu.memory_space<vmem>>, vector<16x128xf32>
    tpu.vector_store %arg14[%c0_35, %c0_36], %72 {strides = array<i32>} : memref<16x128xf32, #tpu.memory_space<vmem>>, vector<16x128xf32>,
    return
  }
  func.func @transform_0(%arg0: i32) -> (i32, i32) {
    %c0_i32 = arith.constant 0 : i32
    %c0_i32_0 = arith.constant 0 : i32
    return %arg0, %c0_i32 : i32, i32
  }
  func.func @transform_1(%arg0: i32) -> (i32, i32) {
    %c0_i32 = arith.constant 0 : i32
    %c0_i32_0 = arith.constant 0 : i32
    return %arg0, %c0_i32 : i32, i32
  }
  func.func @transform_2(%arg0: i32) -> (i32, i32) {
    %c0_i32 = arith.constant 0 : i32
    %c0_i32_0 = arith.constant 0 : i32
    %c0_i32_1 = arith.constant 0 : i32
    return %c0_i32, %c0_i32_0 : i32, i32
  }
  func.func @transform_3(%arg0: i32) -> (i32, i32) {
    %c0_i32 = arith.constant 0 : i32
    %c0_i32_0 = arith.constant 0 : i32
    %c0_i32_1 = arith.constant 0 : i32
    return %c0_i32, %c0_i32_0 : i32, i32
  }
  func.func @transform_4(%arg0: i32) -> (i32, i32) {
    %c0_i32 = arith.constant 0 : i32
    %c0_i32_0 = arith.constant 0 : i32
    %c0_i32_1 = arith.constant 0 : i32
    return %c0_i32, %c0_i32_0 : i32, i32
  }
  func.func @transform_5(%arg0: i32) -> (i32, i32) {
    %c0_i32 = arith.constant 0 : i32
    %c0_i32_0 = arith.constant 0 : i32
    %c0_i32_1 = arith.constant 0 : i32
    return %c0_i32, %c0_i32_0 : i32, i32
  }
  func.func @transform_6(%arg0: i32) -> (i32, i32) {
    %c0_i32 = arith.constant 0 : i32
    %c0_i32_0 = arith.constant 0 : i32
    %c0_i32_1 = arith.constant 0 : i32
    return %c0_i32, %c0_i32_0 : i32, i32
  }
  func.func @transform_7(%arg0: i32) -> (i32, i32) {
    %c0_i32 = arith.constant 0 : i32
    %c0_i32_0 = arith.constant 0 : i32
    %c0_i32_1 = arith.constant 0 : i32
    return %c0_i32, %c0_i32_0 : i32, i32
  }
  func.func @transform_8(%arg0: i32) -> (i32, i32) {
    %c0_i32 = arith.constant 0 : i32
    %c0_i32_0 = arith.constant 0 : i32
    %c0_i32_1 = arith.constant 0 : i32
    return %c0_i32, %c0_i32_0 : i32, i32
  }
  func.func @transform_9(%arg0: i32) -> (i32, i32) {
    %c0_i32 = arith.constant 0 : i32
    %c0_i32_0 = arith.constant 0 : i32
    %c0_i32_1 = arith.constant 0 : i32
    return %c0_i32, %c0_i32_0 : i32, i32
  }
  func.func @transform_10(%arg0: i32) -> (i32, i32) {
    %c0_i32 = arith.constant 0 : i32
    %c0_i32_0 = arith.constant 0 : i32
    %c0_i32_1 = arith.constant 0 : i32
    return %c0_i32, %c0_i32_0 : i32, i32
  }
  func.func @transform_11(%arg0: i32) -> (i32, i32) {
    %c0_i32 = arith.constant 0 : i32
    %c0_i32_0 = arith.constant 0 : i32
    %c0_i32_1 = arith.constant 0 : i32
    return %c0_i32, %c0_i32_0 : i32, i32
  }
  func.func @transform_12(%arg0: i32) -> (i32, i32) {
    %c0_i32 = arith.constant 0 : i32
    %c0_i32_0 = arith.constant 0 : i32
    return %arg0, %c0_i32 : i32, i32
  }
  func.func @transform_13(%arg0: i32) -> (i32, i32) {
    %c0_i32 = arith.constant 0 : i32
    %c0_i32_0 = arith.constant 0 : i32
    return %arg0, %c0_i32 : i32, i32
  }
}

</mosaic_0001>

<llo_original>
// kernel: acmodel_forward.1
$region0: #{acmodel_forward.1}
  #allocation0 [shape = 'u32[]', space=smem, size = 0x4, offset = 0x4, fixed_abs, tag = 'smem constant byte address 0x4 - core index']
  #allocation1 [shape = 'u32[144,128]{1,0:T(1,128)}', space=vmem, size = 0x12000, scoped, tag = 'internal scratch']
  %s0 = inlined_call_operand.vmem [shape: bf16[16,153], index: 0, kind: input, shape index: {}]
  %s1 = inlined_call_operand.vmem [shape: f32[16,128], index: 1, kind: input, shape index: {}, may-alias: {1,13}]
  %s2 = inlined_call_operand.vmem [shape: bf16[153,64], index: 2, kind: input, shape index: {}]
  %s3 = inlined_call_operand.vmem [shape: f32[1,64], index: 3, kind: input, shape index: {}]
  %s4 = inlined_call_operand.vmem [shape: bf16[64,256], index: 4, kind: input, shape index: {}]
  %s5 = inlined_call_operand.vmem [shape: bf16[64,256], index: 5, kind: input, shape index: {}]
  %s6 = inlined_call_operand.vmem [shape: f32[1,256], index: 6, kind: input, shape index: {}]
  %s7 = inlined_call_operand.vmem [shape: bf16[64,256], index: 7, kind: input, shape index: {}]
  %s8 = inlined_call_operand.vmem [shape: bf16[153,256], index: 8, kind: input, shape index: {}]
  %s9 = inlined_call_operand.vmem [shape: f32[1,256], index: 9, kind: input, shape index: {}]
  %s10 = inlined_call_operand.vmem [shape: bf16[256,128], index: 10, kind: input, shape index: {}]
  %s11 = inlined_call_operand.vmem [shape: f32[1,128], index: 11, kind: input, shape index: {}]
  %s12 = inlined_call_operand.vmem [shape: f32[16,128], index: 12, kind: output, shape index: {0}]
  %s13 = inlined_call_operand.vmem [shape: f32[16,128], index: 13, kind: output, shape index: {1}, may-alias: {1,13}]
  %14 = xla_tuple %s12, %s13
  %s15 = sld [smem:[#allocation0]]
  $region66: #{acmodel_forward.1} parent=0
    _
  %s17 = ssub.s32 1, %s15
  %s18 = scalar_select 0, %s17, %s15
  // Predicated region
  $region2: #{acmodel_forward.1} parent=0 // pred_check
    _
  $region3: #{acmodel_forward.1} parent=0 // pred_check_branch
    %20 = sbr.rel (0) target = $region5
  $region4: #{acmodel_forward.1} parent=0 // pred_region
    _
  $region5: #{acmodel_forward.1} parent=0 // pred_fallthru
    _
  // Predicated region
  $region6: #{acmodel_forward.1} parent=0 // pred_check
    _
  $region7: #{acmodel_forward.1} parent=0 // pred_check_branch
    %22 = sbr.rel (0) target = $region9
  $region8: #{acmodel_forward.1} parent=0 // pred_region
    _
  $region9: #{acmodel_forward.1} parent=0 // pred_fallthru
    _
  // Predicated region
  $region10: #{acmodel_forward.1} parent=0 // pred_check
    _
  $region11: #{acmodel_forward.1} parent=0 // pred_check_branch
    %24 = sbr.rel (0) target = $region13
  $region12: #{acmodel_forward.1} parent=0 // pred_region
    _
  $region13: #{acmodel_forward.1} parent=0 // pred_fallthru
    _
  // Predicated region
  $region14: #{acmodel_forward.1} parent=0 // pred_check
    _
  $region15: #{acmodel_forward.1} parent=0 // pred_check_branch
    %26 = sbr.rel (0) target = $region17
  $region16: #{acmodel_forward.1} parent=0 // pred_region
    _
  $region17: #{acmodel_forward.1} parent=0 // pred_fallthru
    _
  // Predicated region
  $region18: #{acmodel_forward.1} parent=0 // pred_check
    _
  $region19: #{acmodel_forward.1} parent=0 // pred_check_branch
    %28 = sbr.rel (0) target = $region21
  $region20: #{acmodel_forward.1} parent=0 // pred_region
    _
  $region21: #{acmodel_forward.1} parent=0 // pred_fallthru
    _
  // Predicated region
  $region22: #{acmodel_forward.1} parent=0 // pred_check
    _
  $region23: #{acmodel_forward.1} parent=0 // pred_check_branch
    %30 = sbr.rel (0) target = $region25
  $region24: #{acmodel_forward.1} parent=0 // pred_region
    _
  $region25: #{acmodel_forward.1} parent=0 // pred_fallthru
    _
  // Predicated region
  $region26: #{acmodel_forward.1} parent=0 // pred_check
    _
  $region27: #{acmodel_forward.1} parent=0 // pred_check_branch
    %32 = sbr.rel (0) target = $region29
  $region28: #{acmodel_forward.1} parent=0 // pred_region
    _
  $region29: #{acmodel_forward.1} parent=0 // pred_fallthru
    _
  // Predicated region
  $region30: #{acmodel_forward.1} parent=0 // pred_check
    _
  $region31: #{acmodel_forward.1} parent=0 // pred_check_branch
    %34 = sbr.rel (0) target = $region33
  $region32: #{acmodel_forward.1} parent=0 // pred_region
    _
  $region33: #{acmodel_forward.1} parent=0 // pred_fallthru
    _
  // Predicated region
  $region34: #{acmodel_forward.1} parent=0 // pred_check
    _
  $region35: #{acmodel_forward.1} parent=0 // pred_check_branch
    %36 = sbr.rel (0) target = $region37
  $region36: #{acmodel_forward.1} parent=0 // pred_region
    _
  $region37: #{acmodel_forward.1} parent=0 // pred_fallthru
    _
  // Predicated region
  $region38: #{acmodel_forward.1} parent=0 // pred_check
    _
  $region39: #{acmodel_forward.1} parent=0 // pred_check_branch
    %38 = sbr.rel (0) target = $region41
  $region40: #{acmodel_forward.1} parent=0 // pred_region
    _
  $region41: #{acmodel_forward.1} parent=0 // pred_fallthru
    _
  // Predicated region
  $region42: #{acmodel_forward.1} parent=0 // pred_check
    _
  $region43: #{acmodel_forward.1} parent=0 // pred_check_branch
    %40 = sbr.rel (0) target = $region45
  $region44: #{acmodel_forward.1} parent=0 // pred_region
    _
  $region45: #{acmodel_forward.1} parent=0 // pred_fallthru
    _
  // Predicated region
  $region46: #{acmodel_forward.1} parent=0 // pred_check
    _
  $region47: #{acmodel_forward.1} parent=0 // pred_check_branch
    %42 = sbr.rel (0) target = $region49
  $region48: #{acmodel_forward.1} parent=0 // pred_region
    _
  $region49: #{acmodel_forward.1} parent=0 // pred_fallthru
    _
  %v44 = vld [vmem:[%s0] sm:$0xff]
  %v45 = vld [vmem:[%s0 + $0x8] sm:$0xff]
  %v46 = vld [vmem:[%s2] sm:$0xf]
  %v47 = vld [vmem:[%s2 + $0x4] sm:$0xf]
  %v48 = vld [vmem:[%s2 + $0x8] sm:$0xf]
  %v49 = vld [vmem:[%s2 + $0xc] sm:$0xf]
  %v50 = vld [vmem:[%s2 + $0x10] sm:$0xf]
  %v51 = vld [vmem:[%s2 + $0x14] sm:$0xf]
  %v52 = vld [vmem:[%s2 + $0x18] sm:$0xf]
  %v53 = vld [vmem:[%s2 + $0x1c] sm:$0xf]
  %v54 = vld [vmem:[%s2 + $0x20] sm:$0xf]
  %v55 = vld [vmem:[%s2 + $0x24] sm:$0xf]
  %v56 = vld [vmem:[%s2 + $0x28] sm:$0xf]
  %v57 = vld [vmem:[%s2 + $0x2c] sm:$0xf]
  %v58 = vld [vmem:[%s2 + $0x30] sm:$0xf]
  %v59 = vld [vmem:[%s2 + $0x34] sm:$0xf]
  %v60 = vld [vmem:[%s2 + $0x38] sm:$0xf]
  %v61 = vld [vmem:[%s2 + $0x3c] sm:$0xf]
  %v62 = vld [vmem:[%s2 + $0x40] sm:$0xf]
  %v63 = vld [vmem:[%s2 + $0x44] sm:$0xf]
  %v64 = vld [vmem:[%s2 + $0x48] sm:$0xf]
  %v65 = vld [vmem:[%s2 + $0x4c] sm:$0x1]
  %v66 = vld [vmem:[%s3] sm:$0x1]
  %v68 = vlaneseq
  %v69 = vshrl.u32 %v68, 7
  %v70 = vsub.s32 0, %v69
  %v71 = vrot.slane %v66, %v70
  %v75 = vunpack.c.l.b16 %v44
  %v76 = vunpack.c.h.b16 %v44
  %v77 = vunpack.c.l.b16 %v45
  %v78 = vunpack.c.h.b16 %v45
  %v79 = vpack.c.b16 %v77, %v75
  %v80 = vpack.c.b16 %v78, %v76
  %v102 = vunpack.c.l.b16 %v46
  %v103 = vunpack.c.l.b16 %v47
  %v104 = vunpack.c.l.b16 %v48
  %v105 = vunpack.c.l.b16 %v49
  %v106 = vunpack.c.l.b16 %v50
  %v107 = vunpack.c.l.b16 %v51
  %v108 = vunpack.c.l.b16 %v52
  %v109 = vunpack.c.l.b16 %v53
  %v110 = vunpack.c.l.b16 %v54
  %v111 = vunpack.c.l.b16 %v55
  %v112 = vunpack.c.l.b16 %v56
  %v113 = vunpack.c.l.b16 %v57
  %v114 = vunpack.c.l.b16 %v58
  %v115 = vunpack.c.l.b16 %v59
  %v116 = vunpack.c.l.b16 %v60
  %v117 = vunpack.c.l.b16 %v61
  %v118 = vunpack.c.l.b16 %v62
  %v119 = vunpack.c.l.b16 %v63
  %v120 = vunpack.c.l.b16 %v64
  %v121 = vunpack.c.l.b16 %v65
  %v122 = vpack.c.b16 %v103, %v102
  %v123 = vpack.c.b16 %v105, %v104
  %v124 = vpack.c.b16 %v107, %v106
  %v125 = vpack.c.b16 %v109, %v108
  %v126 = vpack.c.b16 %v111, %v110
  %v127 = vpack.c.b16 %v113, %v112
  %v128 = vpack.c.b16 %v115, %v114
  %v129 = vpack.c.b16 %v117, %v116
  %v130 = vpack.c.b16 %v119, %v118
  %v131 = vpack.c.b16 %v121, %v120
  %vm141 = vcmask 203776
  %v143 = vsel %vm141, %v80, 0
  %vm145 = vcmask 1043456
  %vm146 = vcmask 1044480
  %v147 = vsel %vm145, 4294967295, 65535
  %v148 = vsel %vm146, %v147, 0
  %v150 = vand.u32 %v131, %v148
  %152 = vmatprep.subr.bf16.mxu0 0
  %153 = vmatpush1.bf16.msra.mxu0 %v129
  %154 = vmatprep.subr.bf16.mxu0 0
  %155 = vmatpush1.bf16.msra.mxu0 %v128
  %156 = vmatprep.subr.bf16.mxu0 0
  %157 = vmatpush1.bf16.msra.mxu0 %v127
  %158 = vmatprep.subr.bf16.mxu0 0
  %159 = vmatpush1.bf16.msra.mxu0 %v126
  %160 = vmatprep.subr.bf16.mxu0 0
  %161 = vmatpush1.bf16.msra.mxu0 %v125
  %162 = vmatprep.subr.bf16.mxu0 0
  %163 = vmatpush1.bf16.msra.mxu0 %v124
  %164 = vmatprep.subr.bf16.mxu0 0
  %165 = vmatpush1.bf16.msra.mxu0 %v123
  %166 = vmatprep.subr.bf16.mxu0 0
  %167 = vmatpush1.bf16.msra.mxu0 %v122
  %168 = vmatprep.subr.bf16.mxu0 0
  %169 = vmatpush2.bf16.msra.mxu0 0
  %170 = vmatprep.subr.bf16.mxu0 0
  %171 = vmatpush2.bf16.msra.mxu0 0
  %172 = vmatprep.subr.bf16.mxu0 0
  %173 = vmatpush2.bf16.msra.mxu0 0
  %174 = vmatprep.subr.bf16.mxu0 0
  %175 = vmatpush2.bf16.msra.mxu0 0
  %176 = vmatprep.subr.bf16.mxu0 0
  %177 = vmatpush2.bf16.msra.mxu0 0
  %178 = vmatprep.subr.bf16.mxu0 0
  %179 = vmatpush2.bf16.msra.mxu0 0
  %180 = vmatprep.subr.bf16.mxu0 0
  %181 = vmatpush2.bf16.msra.mxu0 %v150
  %182 = vmatprep.subr.bf16.mxu0 0
  %183 = vmatpush2.bf16.msra.mxu0 %v130
  %184 = vmatprep.mubr.bf16.mxu0 %v143
  %185 = vmatmul.mubr.bf16.gmra.mxu0 %v79
  %v186 = vpop.f32.mrf.mxu0
  %v187 = vadd.f32 %v71, %v186
  %v188 = vpop.f32.mrf.mxu0
  %v189 = vpop.f32.mrf.mxu0
  %v190 = vadd.f32 %v71, %v189
  %v191 = vpop.f32.mrf.mxu0
  %192 = vdwg.mxu0
  %v193 = vmax.f32 %v187, 0.0
  %v194 = vmax.f32 %v190, 0.0
  %v195 = vld [vmem:[%s1] sm:$0xff]
  %v196 = vld [vmem:[%s1 + $0x8] sm:$0xff]
  %v197 = vpack.c.bf16 %v194, %v193
  %v198 = vld [vmem:[%s4] sm:$0xff]
  %v199 = vld [vmem:[%s4 + $0x8] sm:$0xff]
  %v200 = vld [vmem:[%s4 + $0x10] sm:$0xff]
  %v201 = vld [vmem:[%s4 + $0x18] sm:$0xff]
  %v202 = vld [vmem:[%s4 + $0x20] sm:$0xff]
  %v203 = vld [vmem:[%s4 + $0x28] sm:$0xff]
  %v204 = vld [vmem:[%s4 + $0x30] sm:$0xff]
  %v205 = vld [vmem:[%s4 + $0x38] sm:$0xff]
  %v206 = vpack.c.bf16 %v196, %v195
  %v207 = vld [vmem:[%s5] sm:$0xff]
  %v208 = vld [vmem:[%s5 + $0x8] sm:$0xff]
  %v209 = vld [vmem:[%s5 + $0x10] sm:$0xff]
  %v210 = vld [vmem:[%s5 + $0x18] sm:$0xff]
  %v211 = vld [vmem:[%s5 + $0x20] sm:$0xff]
  %v212 = vld [vmem:[%s5 + $0x28] sm:$0xff]
  %v213 = vld [vmem:[%s5 + $0x30] sm:$0xff]
  %v214 = vld [vmem:[%s5 + $0x38] sm:$0xff]
  %v223 = vunpack.c.l.b16 %v207
  %v224 = vunpack.c.h.b16 %v207
  %v225 = vunpack.c.l.b16 %v208
  %v226 = vunpack.c.h.b16 %v208
  %v227 = vunpack.c.l.b16 %v209
  %v228 = vunpack.c.h.b16 %v209
  %v229 = vunpack.c.l.b16 %v210
  %v230 = vunpack.c.h.b16 %v210
  %v231 = vunpack.c.l.b16 %v211
  %v232 = vunpack.c.h.b16 %v211
  %v233 = vunpack.c.l.b16 %v212
  %v234 = vunpack.c.h.b16 %v212
  %v235 = vunpack.c.l.b16 %v213
  %v236 = vunpack.c.h.b16 %v213
  %v237 = vunpack.c.l.b16 %v214
  %v238 = vunpack.c.h.b16 %v214
  %v239 = vpack.c.b16 %v225, %v223
  %v240 = vpack.c.b16 %v226, %v224
  %v241 = vpack.c.b16 %v229, %v227
  %v242 = vpack.c.b16 %v230, %v228
  %v243 = vpack.c.b16 %v233, %v231
  %v244 = vpack.c.b16 %v234, %v232
  %v245 = vpack.c.b16 %v237, %v235
  %v246 = vpack.c.b16 %v238, %v236
  %vm255 = vcmask 523264
  %v257 = vsel %vm255, %v206, 0
  %259 = vmatprep.subr.bf16.mxu0 0
  %260 = vmatpush1.bf16.msra.mxu0 0
  %261 = vmatprep.subr.bf16.mxu0 0
  %262 = vmatpush1.bf16.msra.mxu0 0
  %263 = vmatprep.subr.bf16.mxu0 0
  %264 = vmatpush1.bf16.msra.mxu0 0
  %265 = vmatprep.subr.bf16.mxu0 0
  %266 = vmatpush1.bf16.msra.mxu0 0
  %267 = vmatprep.subr.bf16.mxu0 %v246
  %268 = vmatpush1.bf16.msra.mxu0 %v245
  %269 = vmatprep.subr.bf16.mxu0 %v244
  %270 = vmatpush1.bf16.msra.mxu0 %v243
  %271 = vmatprep.subr.bf16.mxu0 %v242
  %272 = vmatpush1.bf16.msra.mxu0 %v241
  %273 = vmatprep.subr.bf16.mxu0 %v240
  %274 = vmatpush1.bf16.msra.mxu0 %v239
  %275 = vmatprep.subr.bf16.mxu0 0
  %276 = vmatpush2.bf16.msra.mxu0 0
  %277 = vmatprep.subr.bf16.mxu0 0
  %278 = vmatpush2.bf16.msra.mxu0 0
  %279 = vmatprep.subr.bf16.mxu0 0
  %280 = vmatpush2.bf16.msra.mxu0 0
  %281 = vmatprep.subr.bf16.mxu0 0
  %282 = vmatpush2.bf16.msra.mxu0 0
  %283 = vmatprep.subr.bf16.mxu0 0
  %284 = vmatpush2.bf16.msra.mxu0 0
  %285 = vmatprep.subr.bf16.mxu0 0
  %286 = vmatpush2.bf16.msra.mxu0 0
  %287 = vmatprep.subr.bf16.mxu0 0
  %288 = vmatpush2.bf16.msra.mxu0 0
  %289 = vmatprep.subr.bf16.mxu0 0
  %290 = vmatpush2.bf16.msra.mxu0 0
  %291 = vmatprep.mubr.bf16.mxu0 0
  %292 = vmatmul.mubr.bf16.gmra.mxu0 %v257
  %v293 = vpop.f32.mrf.mxu0
  %v294 = vadd.f32 0.0, %v293
  %v295 = vpop.f32.mrf.mxu0
  %v296 = vadd.f32 0.0, %v295
  %v297 = vpop.f32.mrf.mxu0
  %v298 = vadd.f32 0.0, %v297
  %v299 = vpop.f32.mrf.mxu0
  %v300 = vadd.f32 0.0, %v299
  %301 = vdwg.mxu0
  %v310 = vunpack.c.l.b16 %v198
  %v311 = vunpack.c.h.b16 %v198
  %v312 = vunpack.c.l.b16 %v199
  %v313 = vunpack.c.h.b16 %v199
  %v314 = vunpack.c.l.b16 %v200
  %v315 = vunpack.c.h.b16 %v200
  %v316 = vunpack.c.l.b16 %v201
  %v317 = vunpack.c.h.b16 %v201
  %v318 = vunpack.c.l.b16 %v202
  %v319 = vunpack.c.h.b16 %v202
  %v320 = vunpack.c.l.b16 %v203
  %v321 = vunpack.c.h.b16 %v203
  %v322 = vunpack.c.l.b16 %v204
  %v323 = vunpack.c.h.b16 %v204
  %v324 = vunpack.c.l.b16 %v205
  %v325 = vunpack.c.h.b16 %v205
  %v326 = vpack.c.b16 %v312, %v310
  %v327 = vpack.c.b16 %v313, %v311
  %v328 = vpack.c.b16 %v316, %v314
  %v329 = vpack.c.b16 %v317, %v315
  %v330 = vpack.c.b16 %v320, %v318
  %v331 = vpack.c.b16 %v321, %v319
  %v332 = vpack.c.b16 %v324, %v322
  %v333 = vpack.c.b16 %v325, %v323
  %v343 = vsel %vm255, %v197, 0
  %345 = vmatprep.subr.bf16.mxu0 0
  %346 = vmatpush1.bf16.msra.mxu0 0
  %347 = vmatprep.subr.bf16.mxu0 0
  %348 = vmatpush1.bf16.msra.mxu0 0
  %349 = vmatprep.subr.bf16.mxu0 0
  %350 = vmatpush1.bf16.msra.mxu0 0
  %351 = vmatprep.subr.bf16.mxu0 0
  %352 = vmatpush1.bf16.msra.mxu0 0
  %353 = vmatprep.subr.bf16.mxu0 %v333
  %354 = vmatpush1.bf16.msra.mxu0 %v332
  %355 = vmatprep.subr.bf16.mxu0 %v331
  %356 = vmatpush1.bf16.msra.mxu0 %v330
  %357 = vmatprep.subr.bf16.mxu0 %v329
  %358 = vmatpush1.bf16.msra.mxu0 %v328
  %359 = vmatprep.subr.bf16.mxu0 %v327
  %360 = vmatpush1.bf16.msra.mxu0 %v326
  %361 = vmatprep.subr.bf16.mxu0 0
  %362 = vmatpush2.bf16.msra.mxu0 0
  %363 = vmatprep.subr.bf16.mxu0 0
  %364 = vmatpush2.bf16.msra.mxu0 0
  %365 = vmatprep.subr.bf16.mxu0 0
  %366 = vmatpush2.bf16.msra.mxu0 0
  %367 = vmatprep.subr.bf16.mxu0 0
  %368 = vmatpush2.bf16.msra.mxu0 0
  %369 = vmatprep.subr.bf16.mxu0 0
  %370 = vmatpush2.bf16.msra.mxu0 0
  %371 = vmatprep.subr.bf16.mxu0 0
  %372 = vmatpush2.bf16.msra.mxu0 0
  %373 = vmatprep.subr.bf16.mxu0 0
  %374 = vmatpush2.bf16.msra.mxu0 0
  %375 = vmatprep.subr.bf16.mxu0 0
  %376 = vmatpush2.bf16.msra.mxu0 0
  %377 = vmatprep.mubr.bf16.mxu0 0
  %378 = vmatmul.mubr.bf16.gmra.mxu0 %v343
  %v379 = vpop.f32.mrf.mxu0
  %v380 = vadd.f32 %v294, %v379
  %v381 = vpop.f32.mrf.mxu0
  %v382 = vadd.f32 %v296, %v381
  %v383 = vpop.f32.mrf.mxu0
  %v384 = vadd.f32 %v298, %v383
  %v385 = vpop.f32.mrf.mxu0
  %v386 = vadd.f32 %v300, %v385
  %387 = vdwg.mxu0
  %v388 = vld [vmem:[%s6] sm:$0x3]
  %v390 = vlaneseq
  %v391 = vshrl.u32 %v390, 7
  %v392 = vsub.s32 0, %v391
  %v393 = vrot.slane %v388, %v392
  %v394 = vlaneseq
  %v395 = vshrl.u32 %v394, 7
  %v396 = vsub.s32 1, %v395
  %v397 = vrot.slane %v388, %v396
  %v400 = vadd.f32 %v380, %v393
  %v401 = vadd.f32 %v382, %v397
  %v402 = vadd.f32 %v384, %v393
  %v403 = vadd.f32 %v386, %v397
  %v404 = vxor.u32 %v400, 2147483648
  %v405 = vxor.u32 %v401, 2147483648
  %v406 = vxor.u32 %v402, 2147483648
  %v407 = vxor.u32 %v403, 2147483648
  %v408 = vmul.f32 %v404, 1.442695
  %v409 = vpow.pop %v408
  %v410 = vmul.f32 %v405, 1.442695
  %v411 = vpow.pop %v410
  %v412 = vmul.f32 %v406, 1.442695
  %v413 = vpow.pop %v412
  %v414 = vmul.f32 %v407, 1.442695
  %v415 = vpow.pop %v414
  %v416 = vadd.f32 %v409, 1.0
  %v417 = vadd.f32 %v411, 1.0
  %v418 = vadd.f32 %v413, 1.0
  %v419 = vadd.f32 %v415, 1.0
  %v420 = vrcp.pop %v416
  %v421 = vmul.f32 1.0, %v420
  %v422 = vrcp.pop %v417
  %v423 = vmul.f32 1.0, %v422
  %v424 = vrcp.pop %v418
  %v425 = vmul.f32 1.0, %v424
  %v426 = vrcp.pop %v419
  %v427 = vmul.f32 1.0, %v426
  %v428 = vtanh.pop %v401
  %v429 = vtanh.pop %v403
  %v430 = vmul.f32 %v421, %v195
  %v431 = vmul.f32 %v425, %v196
  %434 = vrot.lane.b32.xlu0 %v428, 64
  %v435 = vpop.permute.xlu0 %434
  %436 = vrot.lane.b32.xlu0 %v429, 64
  %v437 = vpop.permute.xlu0 %436
  %v440 = vmul.f32 %v421, %v435
  %v441 = vmul.f32 %v425, %v437
  %444 = vrot.lane.b32.xlu0 %v440, 64
  %v445 = vpop.permute.xlu0 %444
  %446 = vrot.lane.b32.xlu0 %v441, 64
  %v447 = vpop.permute.xlu0 %446
  %v450 = vadd.f32 %v430, %v445
  %v451 = vadd.f32 %v431, %v447
  %v452 = vtanh.pop %v450
  %v453 = vtanh.pop %v451
  %456 = vrot.lane.b32.xlu0 %v452, 64
  %v457 = vpop.permute.xlu0 %456
  %458 = vrot.lane.b32.xlu0 %v453, 64
  %v459 = vpop.permute.xlu0 %458
  %v462 = vmul.f32 %v423, %v457
  %v463 = vmul.f32 %v427, %v459
  %v464 = vpack.c.bf16 %v463, %v462
  %v465 = vld [vmem:[%s7] sm:$0xff]
  %v466 = vld [vmem:[%s7 + $0x8] sm:$0xff]
  %v467 = vld [vmem:[%s7 + $0x10] sm:$0xff]
  %v468 = vld [vmem:[%s7 + $0x18] sm:$0xff]
  %v469 = vld [vmem:[%s7 + $0x20] sm:$0xff]
  %v470 = vld [vmem:[%s7 + $0x28] sm:$0xff]
  %v471 = vld [vmem:[%s7 + $0x30] sm:$0xff]
  %v472 = vld [vmem:[%s7 + $0x38] sm:$0xff]
  %v473 = vld [vmem:[%s8] sm:$0xff]
  %v474 = vld [vmem:[%s8 + $0x8] sm:$0xff]
  %v475 = vld [vmem:[%s8 + $0x10] sm:$0xff]
  %v476 = vld [vmem:[%s8 + $0x18] sm:$0xff]
  %v477 = vld [vmem:[%s8 + $0x20] sm:$0xff]
  %v478 = vld [vmem:[%s8 + $0x28] sm:$0xff]
  %v479 = vld [vmem:[%s8 + $0x30] sm:$0xff]
  %v480 = vld [vmem:[%s8 + $0x38] sm:$0xff]
  %v481 = vld [vmem:[%s8 + $0x40] sm:$0xff]
  %v482 = vld [vmem:[%s8 + $0x48] sm:$0xff]
  %v483 = vld [vmem:[%s8 + $0x50] sm:$0xff]
  %v484 = vld [vmem:[%s8 + $0x58] sm:$0xff]
  %v485 = vld [vmem:[%s8 + $0x60] sm:$0xff]
  %v486 = vld [vmem:[%s8 + $0x68] sm:$0xff]
  %v487 = vld [vmem:[%s8 + $0x70] sm:$0xff]
  %v488 = vld [vmem:[%s8 + $0x78] sm:$0xff]
  %v489 = vld [vmem:[%s8 + $0x80] sm:$0xff]
  %v490 = vld [vmem:[%s8 + $0x88] sm:$0xff]
  %v491 = vld [vmem:[%s8 + $0x90] sm:$0xff]
  %v492 = vld [vmem:[%s8 + $0x98] sm:$0x11]
  %v513 = vunpack.c.l.b16 %v473
  %v514 = vunpack.c.h.b16 %v473
  %v515 = vunpack.c.l.b16 %v474
  %v516 = vunpack.c.h.b16 %v474
  %v517 = vunpack.c.l.b16 %v475
  %v518 = vunpack.c.h.b16 %v475
  %v519 = vunpack.c.l.b16 %v476
  %v520 = vunpack.c.h.b16 %v476
  %v521 = vunpack.c.l.b16 %v477
  %v522 = vunpack.c.h.b16 %v477
  %v523 = vunpack.c.l.b16 %v478
  %v524 = vunpack.c.h.b16 %v478
  %v525 = vunpack.c.l.b16 %v479
  %v526 = vunpack.c.h.b16 %v479
  %v527 = vunpack.c.l.b16 %v480
  %v528 = vunpack.c.h.b16 %v480
  %v529 = vunpack.c.l.b16 %v481
  %v530 = vunpack.c.h.b16 %v481
  %v531 = vunpack.c.l.b16 %v482
  %v532 = vunpack.c.h.b16 %v482
  %v533 = vunpack.c.l.b16 %v483
  %v534 = vunpack.c.h.b16 %v483
  %v535 = vunpack.c.l.b16 %v484
  %v536 = vunpack.c.h.b16 %v484
  %v537 = vunpack.c.l.b16 %v485
  %v538 = vunpack.c.h.b16 %v485
  %v539 = vunpack.c.l.b16 %v486
  %v540 = vunpack.c.h.b16 %v486
  %v541 = vunpack.c.l.b16 %v487
  %v542 = vunpack.c.h.b16 %v487
  %v543 = vunpack.c.l.b16 %v488
  %v544 = vunpack.c.h.b16 %v488
  %v545 = vunpack.c.l.b16 %v489
  %v546 = vunpack.c.h.b16 %v489
  %v547 = vunpack.c.l.b16 %v490
  %v548 = vunpack.c.h.b16 %v490
  %v549 = vunpack.c.l.b16 %v491
  %v550 = vunpack.c.h.b16 %v491
  %v551 = vunpack.c.l.b16 %v492
  %v552 = vunpack.c.h.b16 %v492
  %v553 = vpack.c.b16 %v515, %v513
  %v554 = vpack.c.b16 %v516, %v514
  %v555 = vpack.c.b16 %v519, %v517
  %v556 = vpack.c.b16 %v520, %v518
  %v557 = vpack.c.b16 %v523, %v521
  %v558 = vpack.c.b16 %v524, %v522
  %v559 = vpack.c.b16 %v527, %v525
  %v560 = vpack.c.b16 %v528, %v526
  %v561 = vpack.c.b16 %v531, %v529
  %v562 = vpack.c.b16 %v532, %v530
  %v563 = vpack.c.b16 %v535, %v533
  %v564 = vpack.c.b16 %v536, %v534
  %v565 = vpack.c.b16 %v539, %v537
  %v566 = vpack.c.b16 %v540, %v538
  %v567 = vpack.c.b16 %v543, %v541
  %v568 = vpack.c.b16 %v544, %v542
  %v569 = vpack.c.b16 %v547, %v545
  %v570 = vpack.c.b16 %v548, %v546
  %v571 = vpack.c.b16 %v551, %v549
  %v572 = vpack.c.b16 %v552, %v550
  %v592 = vand.u32 %v571, %v148
  %v595 = vand.u32 %v572, %v148
  %597 = vmatprep.subr.bf16.mxu0 %v568
  %598 = vmatpush1.bf16.msra.mxu0 %v567
  %599 = vmatprep.subr.bf16.mxu0 %v566
  %600 = vmatpush1.bf16.msra.mxu0 %v565
  %601 = vmatprep.subr.bf16.mxu0 %v564
  %602 = vmatpush1.bf16.msra.mxu0 %v563
  %603 = vmatprep.subr.bf16.mxu0 %v562
  %604 = vmatpush1.bf16.msra.mxu0 %v561
  %605 = vmatprep.subr.bf16.mxu0 %v560
  %606 = vmatpush1.bf16.msra.mxu0 %v559
  %607 = vmatprep.subr.bf16.mxu0 %v558
  %608 = vmatpush1.bf16.msra.mxu0 %v557
  %609 = vmatprep.subr.bf16.mxu0 %v556
  %610 = vmatpush1.bf16.msra.mxu0 %v555
  %611 = vmatprep.subr.bf16.mxu0 %v554
  %612 = vmatpush1.bf16.msra.mxu0 %v553
  %613 = vmatprep.subr.bf16.mxu0 0
  %614 = vmatpush2.bf16.msra.mxu0 0
  %615 = vmatprep.subr.bf16.mxu0 0
  %616 = vmatpush2.bf16.msra.mxu0 0
  %617 = vmatprep.subr.bf16.mxu0 0
  %618 = vmatpush2.bf16.msra.mxu0 0
  %619 = vmatprep.subr.bf16.mxu0 0
  %620 = vmatpush2.bf16.msra.mxu0 0
  %621 = vmatprep.subr.bf16.mxu0 0
  %622 = vmatpush2.bf16.msra.mxu0 0
  %623 = vmatprep.subr.bf16.mxu0 0
  %624 = vmatpush2.bf16.msra.mxu0 0
  %625 = vmatprep.subr.bf16.mxu0 %v595
  %626 = vmatpush2.bf16.msra.mxu0 %v592
  %627 = vmatprep.subr.bf16.mxu0 %v570
  %628 = vmatpush2.bf16.msra.mxu0 %v569
  %629 = vmatprep.mubr.bf16.mxu0 %v143
  %630 = vmatmul.mubr.bf16.gmra.mxu0 %v79
  %v631 = vpop.f32.mrf.mxu0
  %v632 = vadd.f32 0.0, %v631
  %v633 = vpop.f32.mrf.mxu0
  %v634 = vadd.f32 0.0, %v633
  %v635 = vpop.f32.mrf.mxu0
  %v636 = vadd.f32 0.0, %v635
  %v637 = vpop.f32.mrf.mxu0
  %v638 = vadd.f32 0.0, %v637
  %639 = vdwg.mxu0
  %v648 = vunpack.c.l.b16 %v465
  %v649 = vunpack.c.h.b16 %v465
  %v650 = vunpack.c.l.b16 %v466
  %v651 = vunpack.c.h.b16 %v466
  %v652 = vunpack.c.l.b16 %v467
  %v653 = vunpack.c.h.b16 %v467
  %v654 = vunpack.c.l.b16 %v468
  %v655 = vunpack.c.h.b16 %v468
  %v656 = vunpack.c.l.b16 %v469
  %v657 = vunpack.c.h.b16 %v469
  %v658 = vunpack.c.l.b16 %v470
  %v659 = vunpack.c.h.b16 %v470
  %v660 = vunpack.c.l.b16 %v471
  %v661 = vunpack.c.h.b16 %v471
  %v662 = vunpack.c.l.b16 %v472
  %v663 = vunpack.c.h.b16 %v472
  %v664 = vpack.c.b16 %v650, %v648
  %v665 = vpack.c.b16 %v651, %v649
  %v666 = vpack.c.b16 %v654, %v652
  %v667 = vpack.c.b16 %v655, %v653
  %v668 = vpack.c.b16 %v658, %v656
  %v669 = vpack.c.b16 %v659, %v657
  %v670 = vpack.c.b16 %v662, %v660
  %v671 = vpack.c.b16 %v663, %v661
  %v681 = vsel %vm255, %v464, 0
  %683 = vmatprep.subr.bf16.mxu0 0
  %684 = vmatpush1.bf16.msra.mxu0 0
  %685 = vmatprep.subr.bf16.mxu0 0
  %686 = vmatpush1.bf16.msra.mxu0 0
  %687 = vmatprep.subr.bf16.mxu0 0
  %688 = vmatpush1.bf16.msra.mxu0 0
  %689 = vmatprep.subr.bf16.mxu0 0
  %690 = vmatpush1.bf16.msra.mxu0 0
  %691 = vmatprep.subr.bf16.mxu0 %v671
  %692 = vmatpush1.bf16.msra.mxu0 %v670
  %693 = vmatprep.subr.bf16.mxu0 %v669
  %694 = vmatpush1.bf16.msra.mxu0 %v668
  %695 = vmatprep.subr.bf16.mxu0 %v667
  %696 = vmatpush1.bf16.msra.mxu0 %v666
  %697 = vmatprep.subr.bf16.mxu0 %v665
  %698 = vmatpush1.bf16.msra.mxu0 %v664
  %699 = vmatprep.subr.bf16.mxu0 0
  %700 = vmatpush2.bf16.msra.mxu0 0
  %701 = vmatprep.subr.bf16.mxu0 0
  %702 = vmatpush2.bf16.msra.mxu0 0
  %703 = vmatprep.subr.bf16.mxu0 0
  %704 = vmatpush2.bf16.msra.mxu0 0
  %705 = vmatprep.subr.bf16.mxu0 0
  %706 = vmatpush2.bf16.msra.mxu0 0
  %707 = vmatprep.subr.bf16.mxu0 0
  %708 = vmatpush2.bf16.msra.mxu0 0
  %709 = vmatprep.subr.bf16.mxu0 0
  %710 = vmatpush2.bf16.msra.mxu0 0
  %711 = vmatprep.subr.bf16.mxu0 0
  %712 = vmatpush2.bf16.msra.mxu0 0
  %713 = vmatprep.subr.bf16.mxu0 0
  %714 = vmatpush2.bf16.msra.mxu0 0
  %715 = vmatprep.mubr.bf16.mxu0 0
  %716 = vmatmul.mubr.bf16.gmra.mxu0 %v681
  %v717 = vpop.f32.mrf.mxu0
  %v718 = vadd.f32 %v632, %v717
  %v719 = vpop.f32.mrf.mxu0
  %v720 = vadd.f32 %v634, %v719
  %v721 = vpop.f32.mrf.mxu0
  %v722 = vadd.f32 %v636, %v721
  %v723 = vpop.f32.mrf.mxu0
  %v724 = vadd.f32 %v638, %v723
  %725 = vdwg.mxu0
  %v726 = vld [vmem:[%s9] sm:$0x3]
  %v728 = vlaneseq
  %v729 = vshrl.u32 %v728, 7
  %v730 = vsub.s32 0, %v729
  %v731 = vrot.slane %v726, %v730
  %v732 = vlaneseq
  %v733 = vshrl.u32 %v732, 7
  %v734 = vsub.s32 1, %v733
  %v735 = vrot.slane %v726, %v734
  %v738 = vadd.f32 %v718, %v731
  %v739 = vadd.f32 %v720, %v735
  %v740 = vadd.f32 %v722, %v731
  %v741 = vadd.f32 %v724, %v735
  %v742 = vtanh.pop %v738
  %v743 = vtanh.pop %v739
  %v744 = vtanh.pop %v740
  %v745 = vtanh.pop %v741
  %v746 = vpack.c.bf16 %v744, %v742
  %v747 = vpack.c.bf16 %v745, %v743
  %v748 = vld [vmem:[%s10] sm:$0xf]
  %v749 = vld [vmem:[%s10 + $0x4] sm:$0xf]
  %v750 = vld [vmem:[%s10 + $0x8] sm:$0xf]
  %v751 = vld [vmem:[%s10 + $0xc] sm:$0xf]
  %v752 = vld [vmem:[%s10 + $0x10] sm:$0xf]
  %v753 = vld [vmem:[%s10 + $0x14] sm:$0xf]
  %v754 = vld [vmem:[%s10 + $0x18] sm:$0xf]
  %v755 = vld [vmem:[%s10 + $0x1c] sm:$0xf]
  %v756 = vld [vmem:[%s10 + $0x20] sm:$0xf]
  %v757 = vld [vmem:[%s10 + $0x24] sm:$0xf]
  %v758 = vld [vmem:[%s10 + $0x28] sm:$0xf]
  %v759 = vld [vmem:[%s10 + $0x2c] sm:$0xf]
  %v760 = vld [vmem:[%s10 + $0x30] sm:$0xf]
  %v761 = vld [vmem:[%s10 + $0x34] sm:$0xf]
  %v762 = vld [vmem:[%s10 + $0x38] sm:$0xf]
  %v763 = vld [vmem:[%s10 + $0x3c] sm:$0xf]
  %v764 = vld [vmem:[%s10 + $0x40] sm:$0xf]
  %v765 = vld [vmem:[%s10 + $0x44] sm:$0xf]
  %v766 = vld [vmem:[%s10 + $0x48] sm:$0xf]
  %v767 = vld [vmem:[%s10 + $0x4c] sm:$0xf]
  %v768 = vld [vmem:[%s10 + $0x50] sm:$0xf]
  %v769 = vld [vmem:[%s10 + $0x54] sm:$0xf]
  %v770 = vld [vmem:[%s10 + $0x58] sm:$0xf]
  %v771 = vld [vmem:[%s10 + $0x5c] sm:$0xf]
  %v772 = vld [vmem:[%s10 + $0x60] sm:$0xf]
  %v773 = vld [vmem:[%s10 + $0x64] sm:$0xf]
  %v774 = vld [vmem:[%s10 + $0x68] sm:$0xf]
  %v775 = vld [vmem:[%s10 + $0x6c] sm:$0xf]
  %v776 = vld [vmem:[%s10 + $0x70] sm:$0xf]
  %v777 = vld [vmem:[%s10 + $0x74] sm:$0xf]
  %v778 = vld [vmem:[%s10 + $0x78] sm:$0xf]
  %v779 = vld [vmem:[%s10 + $0x7c] sm:$0xf]
  %v780 = vld [vmem:[%s11] sm:$0x1]
  %v782 = vlaneseq
  %v783 = vshrl.u32 %v782, 7
  %v784 = vsub.s32 0, %v783
  %v785 = vrot.slane %v780, %v784
  %v819 = vunpack.c.l.b16 %v748
  %v820 = vunpack.c.l.b16 %v749
  %v821 = vunpack.c.l.b16 %v750
  %v822 = vunpack.c.l.b16 %v751
  %v823 = vunpack.c.l.b16 %v752
  %v824 = vunpack.c.l.b16 %v753
  %v825 = vunpack.c.l.b16 %v754
  %v826 = vunpack.c.l.b16 %v755
  %v827 = vunpack.c.l.b16 %v756
  %v828 = vunpack.c.l.b16 %v757
  %v829 = vunpack.c.l.b16 %v758
  %v830 = vunpack.c.l.b16 %v759
  %v831 = vunpack.c.l.b16 %v760
  %v832 = vunpack.c.l.b16 %v761
  %v833 = vunpack.c.l.b16 %v762
  %v834 = vunpack.c.l.b16 %v763
  %v835 = vunpack.c.l.b16 %v764
  %v836 = vunpack.c.l.b16 %v765
  %v837 = vunpack.c.l.b16 %v766
  %v838 = vunpack.c.l.b16 %v767
  %v839 = vunpack.c.l.b16 %v768
  %v840 = vunpack.c.l.b16 %v769
  %v841 = vunpack.c.l.b16 %v770
  %v842 = vunpack.c.l.b16 %v771
  %v843 = vunpack.c.l.b16 %v772
  %v844 = vunpack.c.l.b16 %v773
  %v845 = vunpack.c.l.b16 %v774
  %v846 = vunpack.c.l.b16 %v775
  %v847 = vunpack.c.l.b16 %v776
  %v848 = vunpack.c.l.b16 %v777
  %v849 = vunpack.c.l.b16 %v778
  %v850 = vunpack.c.l.b16 %v779
  %v851 = vpack.c.b16 %v820, %v819
  %v852 = vpack.c.b16 %v822, %v821
  %v853 = vpack.c.b16 %v824, %v823
  %v854 = vpack.c.b16 %v826, %v825
  %v855 = vpack.c.b16 %v828, %v827
  %v856 = vpack.c.b16 %v830, %v829
  %v857 = vpack.c.b16 %v832, %v831
  %v858 = vpack.c.b16 %v834, %v833
  %v859 = vpack.c.b16 %v836, %v835
  %v860 = vpack.c.b16 %v838, %v837
  %v861 = vpack.c.b16 %v840, %v839
  %v862 = vpack.c.b16 %v842, %v841
  %v863 = vpack.c.b16 %v844, %v843
  %v864 = vpack.c.b16 %v846, %v845
  %v865 = vpack.c.b16 %v848, %v847
  %v866 = vpack.c.b16 %v850, %v849
  %883 = vmatprep.subr.bf16.mxu0 0
  %884 = vmatpush1.bf16.msra.mxu0 %v858
  %885 = vmatprep.subr.bf16.mxu0 0
  %886 = vmatpush1.bf16.msra.mxu0 %v857
  %887 = vmatprep.subr.bf16.mxu0 0
  %888 = vmatpush1.bf16.msra.mxu0 %v856
  %889 = vmatprep.subr.bf16.mxu0 0
  %890 = vmatpush1.bf16.msra.mxu0 %v855
  %891 = vmatprep.subr.bf16.mxu0 0
  %892 = vmatpush1.bf16.msra.mxu0 %v854
  %893 = vmatprep.subr.bf16.mxu0 0
  %894 = vmatpush1.bf16.msra.mxu0 %v853
  %895 = vmatprep.subr.bf16.mxu0 0
  %896 = vmatpush1.bf16.msra.mxu0 %v852
  %897 = vmatprep.subr.bf16.mxu0 0
  %898 = vmatpush1.bf16.msra.mxu0 %v851
  %899 = vmatprep.subr.bf16.mxu0 0
  %900 = vmatpush2.bf16.msra.mxu0 %v866
  %901 = vmatprep.subr.bf16.mxu0 0
  %902 = vmatpush2.bf16.msra.mxu0 %v865
  %903 = vmatprep.subr.bf16.mxu0 0
  %904 = vmatpush2.bf16.msra.mxu0 %v864
  %905 = vmatprep.subr.bf16.mxu0 0
  %906 = vmatpush2.bf16.msra.mxu0 %v863
  %907 = vmatprep.subr.bf16.mxu0 0
  %908 = vmatpush2.bf16.msra.mxu0 %v862
  %909 = vmatprep.subr.bf16.mxu0 0
  %910 = vmatpush2.bf16.msra.mxu0 %v861
  %911 = vmatprep.subr.bf16.mxu0 0
  %912 = vmatpush2.bf16.msra.mxu0 %v860
  %913 = vmatprep.subr.bf16.mxu0 0
  %914 = vmatpush2.bf16.msra.mxu0 %v859
  %915 = vmatprep.mubr.bf16.mxu0 %v747
  %916 = vmatmul.mubr.bf16.gmra.mxu0 %v746
  %v917 = vpop.f32.mrf.mxu0
  %v918 = vadd.f32 %v785, %v917
  %v919 = vpop.f32.mrf.mxu0
  %v920 = vpop.f32.mrf.mxu0
  %v921 = vadd.f32 %v785, %v920
  %v922 = vpop.f32.mrf.mxu0
  %923 = vdwg.mxu0
  %v924 = vlaneseq
  %v925 = vand.u32 %v924, 127
  %vm926 = vcmp.lt.s32.totalorder %v925, 7
  %v927 = vsel %vm926, %v918, -inf
  %v928 = vsel %vm926, %v921, -inf
  %929 = vmax.xlane.f32.xlu0 %v927
  %v930 = vpop.xlane.xlu0 %929
  %931 = vmax.xlane.f32.xlu0 %v928
  %v932 = vpop.xlane.xlu0 %931
  %v933 = vsub.f32 %v927, %v930
  %v934 = vsub.f32 %v928, %v932
  %v935 = vmul.f32 %v933, 1.442695
  %v936 = vpow.pop %v935
  %v937 = vmul.f32 %v934, 1.442695
  %v938 = vpow.pop %v937
  %939 = vadd.xlane.f32.xlu0 %v936
  %v940 = vpop.xlane.xlu0 %939
  %941 = vadd.xlane.f32.xlu0 %v938
  %v942 = vpop.xlane.xlu0 %941
  %v943 = vlog2.pop %v940
  %v944 = vmul.f32 %v943, 0.6931472
  %v945 = vlog2.pop %v942
  %v946 = vmul.f32 %v945, 0.6931472
  %v947 = vsub.f32 %v918, %v930
  %v948 = vsub.f32 %v921, %v932
  %v949 = vsub.f32 %v947, %v944
  %v950 = vsub.f32 %v948, %v946
  %v951 = vsel %vm926, %v949, %v918
  %v952 = vsel %vm926, %v950, %v921
  %953 = vst [vmem:[%s12] sm:$0xff] %v951
  %954 = vst [vmem:[%s12 + $0x8] sm:$0xff] %v952
  %v955 = vsel %vm255, %v462, %v450
  %v956 = vsel %vm255, %v463, %v451
  %957 = vst [vmem:[%s13] sm:$0xff] %v955
  %958 = vst [vmem:[%s13 + $0x8] sm:$0xff] %v956
  // Predicated region
  $region50: #{acmodel_forward.1} parent=0 // pred_check
    _
  $region51: #{acmodel_forward.1} parent=0 // pred_check_branch
    %960 = sbr.rel (0) target = $region53
  $region52: #{acmodel_forward.1} parent=0 // pred_region
    _
  $region53: #{acmodel_forward.1} parent=0 // pred_fallthru
    _
  // Predicated region
  $region54: #{acmodel_forward.1} parent=0 // pred_check
    _
  $region55: #{acmodel_forward.1} parent=0 // pred_check_branch
    %962 = sbr.rel (0) target = $region57
  $region56: #{acmodel_forward.1} parent=0 // pred_region
    _
  $region57: #{acmodel_forward.1} parent=0 // pred_fallthru
    _
  // Predicated region
  $region58: #{acmodel_forward.1} parent=0 // pred_check
    _
  $region59: #{acmodel_forward.1} parent=0 // pred_check_branch
    %964 = sbr.rel (0) target = $region61
  $region60: #{acmodel_forward.1} parent=0 // pred_region
    _
  $region61: #{acmodel_forward.1} parent=0 // pred_fallthru
    _
  // Predicated region
  $region62: #{acmodel_forward.1} parent=0 // pred_check
    _
  $region63: #{acmodel_forward.1} parent=0 // pred_check_branch
    %966 = sbr.rel (0) target = $region65
  $region64: #{acmodel_forward.1} parent=0 // pred_region
    _
  $region65: #{acmodel_forward.1} parent=0 // pred_fallthru
    _

</llo_original>
